<compile_context>
chip_gen: v5e
topology: v5e:2x2
jax: 0.10.0
libtpu: 0.0.40
codegen_flags: <defaults>
</compile_context>

<pallas_src>
import jax
import jax.numpy as jnp
import numpy as np
from jax.experimental import pallas as pl
from jax.experimental.pallas import tpu as pltpu

EPS = 1e-5  # nn.BatchNorm1d default eps


# ---------------------------------------------------------------------------
# Pallas kernel: full FNN_WS forward in one invocation
#   x1_ref   : (B, 196)   flattened im1   (f32; cast to bf16 in-kernel)
#   x2_ref   : (B, 196)   flattened im2
#   w1_ref   : (196, 196) shared layer-1 weight, [in, out], bf16
#   bn1_ref  : (2, 196)   rows = [gamma1, beta1]           (f32)
#   w2_ref   : (196, 10)  shared layer-2 weight, bf16
#   bn2_ref  : (2, 10)    rows = [gamma2, beta2]           (f32)
#   pred_ref : (6, 10)    rows = [Wp[:10,0], Wp[10:,0], Wp[:10,1], Wp[10:,1],
#                                 bp0 (bcast), bp1 (bcast)] (f32)
#   out_ref  : (B, 2)     softmax(predictor(cat(d1,d2)))
# ---------------------------------------------------------------------------
def fnn_ws_kernel(x1_ref, x2_ref, w1_ref, bn1_ref, w2_ref, bn2_ref, pred_ref,
                  out_ref):
    B = x1_ref.shape[0]

    g1, be1 = bn1_ref[0:1, :], bn1_ref[1:2, :]   # (1, 196)
    g2, be2 = bn2_ref[0:1, :], bn2_ref[1:2, :]   # (1, 10)

    # Stack both views in VMEM (no host-side HBM concat pass); bf16 for MXU.
    x = jnp.concatenate([x1_ref[...], x2_ref[...]], axis=0).astype(jnp.bfloat16)

    # Row mask selecting the im1 half of the stacked batch.
    half = jax.lax.broadcasted_iota(jnp.int32, (2 * B, 1), 0) < B

    def bn_scale_shift(xh, gamma, beta):
        # Training-mode BN folded into per-feature scale/shift.
        # Two-pass variance: numerically stable (no E[x^2]-E[x]^2 cancellation).
        mean = jnp.mean(xh, axis=0, keepdims=True)
        diff = xh - mean
        var = jnp.mean(diff * diff, axis=0, keepdims=True)
        scale = gamma * jax.lax.rsqrt(var + EPS)
        shift = beta - mean * scale
        return scale, shift

    def bn_per_half(h, gamma, beta):
        # BN statistics are per image (per half of the stacked batch), matching
        # two separate nn.Module calls; applied in one fused pass over (2B, F).
        sa, ta = bn_scale_shift(h[:B], gamma, beta)
        sb, tb = bn_scale_shift(h[B:], gamma, beta)
        scale = jnp.where(half, sa, sb)
        shift = jnp.where(half, ta, tb)
        return h * scale + shift

    # ---- shared layer 1: ONE MXU matmul for both images (weight sharing) ----
    # Linear bias omitted: BN's batch-mean subtraction cancels it exactly.
    h = jnp.dot(x, w1_ref[...], preferred_element_type=jnp.float32)   # (2B,196) f32
    h = jnp.maximum(bn_per_half(h, g1, be1), 0.0).astype(jnp.bfloat16)

    # ---- shared layer 2: ONE MXU matmul, then per-half BN + one softmax ----
    z = jnp.dot(h, w2_ref[...], preferred_element_type=jnp.float32)   # (2B,10) f32
    z = bn_per_half(z, g2, be2)

    m = jnp.max(z, axis=1, keepdims=True)
    e = jnp.exp(z - m)
    d = e * pl.reciprocal(jnp.sum(e, axis=1, keepdims=True), approx=True)  # (2B,10)

    d1 = d[:B]
    d2 = d[B:]

    # ---- predictor: tiny 20->2 linear kept off the MXU (VPU reduce) ----
    w0a = pred_ref[0:1, :]   # weights on d1 for class 0
    w0b = pred_ref[1:2, :]   # weights on d2 for class 0
    w1a = pred_ref[2:3, :]   # weights on d1 for class 1
    w1b = pred_ref[3:4, :]   # weights on d2 for class 1
    bp0 = pred_ref[4:5, 0:1]
    bp1 = pred_ref[5:6, 0:1]

    l0 = jnp.sum(d1 * w0a + d2 * w0b, axis=1, keepdims=True) + bp0  # (B,1)
    l1 = jnp.sum(d1 * w1a + d2 * w1b, axis=1, keepdims=True) + bp1  # (B,1)

    # Stable 2-class softmax assembled without an in-kernel concat.
    mm = jnp.maximum(l0, l1)
    e0 = jnp.exp(l0 - mm)
    e1 = jnp.exp(l1 - mm)
    inv = pl.reciprocal(e0 + e1, approx=True)
    col = jax.lax.broadcasted_iota(jnp.int32, (B, 2), 1)
    out_ref[...] = jnp.where(col == 0, e0 * inv, e1 * inv)


# ---------------------------------------------------------------------------
# Wrapper: pack parameters into a few lane-dense buffers and call the kernel
# ---------------------------------------------------------------------------
def fnn_ws_forward(im1, im2, params):
    w1, b1, g1, be1, w2, b2, g2, be2, wp, bp = params
    del b1, b2  # cancelled exactly by training-mode BatchNorm

    x1 = im1.reshape(-1, 196).astype(jnp.float32)
    x2 = im2.reshape(-1, 196).astype(jnp.float32)
    B = x1.shape[0]
    # NOTE: per-half slices in the kernel are tile-aligned (free) when B % 8 == 0;
    # other batch sizes still compute correctly, just with extra relayouts.

    bn1 = jnp.concatenate([g1, be1], axis=0)                    # (2, 196)
    bn2 = jnp.concatenate([g2, be2], axis=0)                    # (2, 10)
    pred = jnp.stack([                                          # (6, 10)
        wp[:10, 0], wp[10:, 0], wp[:10, 1], wp[10:, 1],
        jnp.full((10,), bp[0, 0], jnp.float32),
        jnp.full((10,), bp[0, 1], jnp.float32),
    ])

    vmem = pl.BlockSpec(memory_space=pltpu.MemorySpace.VMEM)
    target = pl.pallas_call(
        fnn_ws_kernel,
        out_shape=jax.ShapeDtypeStruct((B, 2), jnp.float32),
        in_specs=[vmem] * 7,
        out_specs=vmem,
    )(x1, x2,
      w1.astype(jnp.bfloat16), bn1,
      w2.astype(jnp.bfloat16), bn2,
      pred)

    # Match the PyTorch forward's return signature.
    return None, None, target


# ---------------------------------------------------------------------------
# Deterministic parameter initialization (PyTorch-style layouts, [in, out])
# ---------------------------------------------------------------------------
def init_params(key):
    def linear(k, fin, fout):
        k1, k2 = jax.random.split(k)
        bound = 1.0 / np.sqrt(fin)
        w = jax.random.uniform(k1, (fin, fout), jnp.float32, -bound, bound)
        b = jax.random.uniform(k2, (1, fout), jnp.float32, -bound, bound)
        return w, b

    k1, k2, k3, k4, k5 = jax.random.split(key, 5)
    w1, b1 = linear(k1, 196, 196)
    w2, b2 = linear(k2, 196, 10)
    wp, bp = linear(k3, 20, 2)

    # Non-trivial BN affine params to exercise the gamma/beta path.
    g1 = 1.0 + 0.1 * jax.random.normal(k4, (1, 196), jnp.float32)
    be1 = 0.1 * jax.random.normal(k5, (1, 196), jnp.float32)
    g2 = jnp.ones((1, 10), jnp.float32)
    be2 = jnp.zeros((1, 10), jnp.float32)

    return (w1, b1, g1, be1, w2, b2, g2, be2, wp, bp)


# ---------------------------------------------------------------------------
# Pure-JAX f32 reference mirroring the PyTorch forward exactly (with biases,
# two-pass variance, full concat predictor) for verification
# ---------------------------------------------------------------------------
def fnn_ws_reference(im1, im2, params):
    w1, b1, g1, be1, w2, b2, g2, be2, wp, bp = params

    def bn(x, gamma, beta):
        mean = jnp.mean(x, axis=0, keepdims=True)
        var = jnp.mean((x - mean) ** 2, axis=0, keepdims=True)
        return (x - mean) / jnp.sqrt(var + EPS) * gamma + beta

    def softmax(x):
        m = jnp.max(x, axis=1, keepdims=True)
        e = jnp.exp(x - m)
        return e / jnp.sum(e, axis=1, keepdims=True)

    def model(x):
        h = x @ w1 + b1
        h = jnp.maximum(bn(h, g1, be1), 0.0)
        h = h @ w2 + b2
        return softmax(bn(h, g2, be2))

    d1 = model(im1.reshape(-1, 196).astype(jnp.float32))
    d2 = model(im2.reshape(-1, 196).astype(jnp.float32))
    logits = jnp.concatenate([d1, d2], axis=1) @ wp + bp
    return None, None, softmax(logits)


if __name__ == "__main__":
    key = jax.random.PRNGKey(0)
    k_im1, k_im2, k_params = jax.random.split(key, 3)

    B = 8  # multiple of 8 -> per-half slices are sublane-tile aligned
    im1 = jax.random.normal(k_im1, (B, 1, 14, 14), jnp.float32)  # 14*14 = 196
    im2 = jax.random.normal(k_im2, (B, 1, 14, 14), jnp.float32)

    params = init_params(k_params)

    _, _, target = fnn_ws_forward(im1, im2, params)
    jax.block_until_ready(target)

    _, _, ref_target = fnn_ws_reference(im1, im2, params)
    # Tolerance accounts for bf16 MXU matmuls + approx EUP reciprocals; the
    # reference is full f32. Outputs are probabilities in [0, 1].
    np.testing.assert_allclose(np.asarray(target), np.asarray(ref_target),
                               rtol=2e-2, atol=2e-2)

    print("KERNEL_OK")
</pallas_src>

<mosaic_0001>
module attributes {stable_mosaic.version = 11 : i64} {
  func.func @fnn_ws_kernel(%arg0: memref<8x196xf32, #tpu.memory_space<vmem>>, %arg1: memref<8x196xf32, #tpu.memory_space<vmem>>, %arg2: memref<196x196xbf16, #tpu.memory_space<vmem>>, %arg3: memref<2x196xf32, #tpu.memory_space<vmem>>, %arg4: memref<196x10xbf16, #tpu.memory_space<vmem>>, %arg5: memref<2x10xf32, #tpu.memory_space<vmem>>, %arg6: memref<6x10xf32, #tpu.memory_space<vmem>>, %arg7: memref<8x2xf32, #tpu.memory_space<vmem>>) attributes {dimension_semantics = [], scalar_prefetch = 0 : i64, scratch_operands = 0 : i64, tpu.core_type = #tpu.core_type<tc>} {
    %c0 = arith.constant 0 : index
    %c0_0 = arith.constant 0 : index
    %0 = vector.load %arg3[%c0, %c0_0] : memref<2x196xf32, #tpu.memory_space<vmem>>, vector<1x196xf32>
    %c1 = arith.constant 1 : index
    %c0_1 = arith.constant 0 : index
    %1 = vector.load %arg3[%c1, %c0_1] : memref<2x196xf32, #tpu.memory_space<vmem>>, vector<1x196xf32>
    %c0_2 = arith.constant 0 : index
    %c0_3 = arith.constant 0 : index
    %2 = vector.load %arg5[%c0_2, %c0_3] : memref<2x10xf32, #tpu.memory_space<vmem>>, vector<1x10xf32>
    %c1_4 = arith.constant 1 : index
    %c0_5 = arith.constant 0 : index
    %3 = vector.load %arg5[%c1_4, %c0_5] : memref<2x10xf32, #tpu.memory_space<vmem>>, vector<1x10xf32>
    %c0_6 = arith.constant 0 : index
    %c0_7 = arith.constant 0 : index
    %4 = vector.load %arg0[%c0_6, %c0_7] : memref<8x196xf32, #tpu.memory_space<vmem>>, vector<8x196xf32>
    %c0_8 = arith.constant 0 : index
    %c0_9 = arith.constant 0 : index
    %5 = vector.load %arg1[%c0_8, %c0_9] : memref<8x196xf32, #tpu.memory_space<vmem>>, vector<8x196xf32>
    %6 = tpu.concatenate %4, %5 in 0 : vector<8x196xf32>, vector<8x196xf32> -> vector<16x196xf32>
    %7 = arith.truncf %6 : vector<16x196xf32> to vector<16x196xbf16>
    %8 = tpu.iota {dimensions = array<i32: 0>} : vector<16x1xi32>
    %c8_i32 = arith.constant 8 : i32
    %9 = vector.broadcast %c8_i32 : i32 to vector<16x1xi32>
    %10 = arith.cmpi slt, %8, %9 : vector<16x1xi32>
    %c0_10 = arith.constant 0 : index
    %c0_11 = arith.constant 0 : index
    %11 = vector.load %arg2[%c0_10, %c0_11] : memref<196x196xbf16, #tpu.memory_space<vmem>>, vector<196x196xbf16>
    %cst = arith.constant dense<0.000000e+00> : vector<16x196xf32>
    %12 = tpu.matmul %7, %11, %cst {dimension_numbers = #tpu.dot_dimension_numbers<[1], [0], [0], [1], [0, 0, 1, 1], [], []>} : vector<16x196xbf16>, vector<196x196xbf16>, vector<16x196xf32> -> vector<16x196xf32>
    %13 = vector.extract_strided_slice %12 {offsets = [0, 0], sizes = [8, 196], strides = [1, 1]} : vector<16x196xf32> to vector<8x196xf32>
    %cst_12 = arith.constant dense<0.000000e+00> : vector<196xf32>
    %14 = vector.multi_reduction <add>, %13, %cst_12 [0] : vector<8x196xf32> to vector<196xf32>
    %15 = vector.shape_cast %14 : vector<196xf32> to vector<1x196xf32>
    %cst_13 = arith.constant 8.000000e+00 : f32
    %16 = vector.broadcast %cst_13 : f32 to vector<1x196xf32>
    %17 = arith.divf %15, %16 : vector<1x196xf32>
    %18 = vector.broadcast %17 : vector<1x196xf32> to vector<8x196xf32>
    %19 = arith.subf %13, %18 : vector<8x196xf32>
    %20 = arith.mulf %19, %19 : vector<8x196xf32>
    %cst_14 = arith.constant dense<0.000000e+00> : vector<196xf32>
    %21 = vector.multi_reduction <add>, %20, %cst_14 [0] : vector<8x196xf32> to vector<196xf32>
    %22 = vector.shape_cast %21 : vector<196xf32> to vector<1x196xf32>
    %cst_15 = arith.constant 8.000000e+00 : f32
    %23 = vector.broadcast %cst_15 : f32 to vector<1x196xf32>
    %24 = arith.divf %22, %23 : vector<1x196xf32>
    %cst_16 = arith.constant 9.99999974E-6 : f32
    %25 = vector.broadcast %cst_16 : f32 to vector<1x196xf32>
    %26 = arith.addf %24, %25 : vector<1x196xf32>
    %27 = math.rsqrt %26 : vector<1x196xf32>
    %28 = arith.mulf %0, %27 : vector<1x196xf32>
    %29 = arith.mulf %17, %28 : vector<1x196xf32>
    %30 = arith.subf %1, %29 : vector<1x196xf32>
    %31 = vector.extract_strided_slice %12 {offsets = [8, 0], sizes = [8, 196], strides = [1, 1]} : vector<16x196xf32> to vector<8x196xf32>
    %cst_17 = arith.constant dense<0.000000e+00> : vector<196xf32>
    %32 = vector.multi_reduction <add>, %31, %cst_17 [0] : vector<8x196xf32> to vector<196xf32>
    %33 = vector.shape_cast %32 : vector<196xf32> to vector<1x196xf32>
    %cst_18 = arith.constant 8.000000e+00 : f32
    %34 = vector.broadcast %cst_18 : f32 to vector<1x196xf32>
    %35 = arith.divf %33, %34 : vector<1x196xf32>
    %36 = vector.broadcast %35 : vector<1x196xf32> to vector<8x196xf32>
    %37 = arith.subf %31, %36 : vector<8x196xf32>
    %38 = arith.mulf %37, %37 : vector<8x196xf32>
    %cst_19 = arith.constant dense<0.000000e+00> : vector<196xf32>
    %39 = vector.multi_reduction <add>, %38, %cst_19 [0] : vector<8x196xf32> to vector<196xf32>
    %40 = vector.shape_cast %39 : vector<196xf32> to vector<1x196xf32>
    %cst_20 = arith.constant 8.000000e+00 : f32
    %41 = vector.broadcast %cst_20 : f32 to vector<1x196xf32>
    %42 = arith.divf %40, %41 : vector<1x196xf32>
    %cst_21 = arith.constant 9.99999974E-6 : f32
    %43 = vector.broadcast %cst_21 : f32 to vector<1x196xf32>
    %44 = arith.addf %42, %43 : vector<1x196xf32>
    %45 = math.rsqrt %44 : vector<1x196xf32>
    %46 = arith.mulf %0, %45 : vector<1x196xf32>
    %47 = arith.mulf %35, %46 : vector<1x196xf32>
    %48 = arith.subf %1, %47 : vector<1x196xf32>
    %49 = vector.shape_cast %10 : vector<16x1xi1> to vector<16x1xi1>
    %50 = vector.broadcast %49 : vector<16x1xi1> to vector<16x196xi1>
    %51 = vector.shape_cast %28 : vector<1x196xf32> to vector<1x196xf32>
    %52 = vector.broadcast %51 : vector<1x196xf32> to vector<16x196xf32>
    %53 = vector.shape_cast %46 : vector<1x196xf32> to vector<1x196xf32>
    %54 = vector.broadcast %53 : vector<1x196xf32> to vector<16x196xf32>
    %55 = arith.select %50, %52, %54 : vector<16x196xi1>, vector<16x196xf32>
    %56 = vector.shape_cast %10 : vector<16x1xi1> to vector<16x1xi1>
    %57 = vector.broadcast %56 : vector<16x1xi1> to vector<16x196xi1>
    %58 = vector.shape_cast %30 : vector<1x196xf32> to vector<1x196xf32>
    %59 = vector.broadcast %58 : vector<1x196xf32> to vector<16x196xf32>
    %60 = vector.shape_cast %48 : vector<1x196xf32> to vector<1x196xf32>
    %61 = vector.broadcast %60 : vector<1x196xf32> to vector<16x196xf32>
    %62 = arith.select %57, %59, %61 : vector<16x196xi1>, vector<16x196xf32>
    %63 = arith.mulf %12, %55 : vector<16x196xf32>
    %64 = arith.addf %63, %62 : vector<16x196xf32>
    %cst_22 = arith.constant 0.000000e+00 : f32
    %65 = vector.broadcast %cst_22 : f32 to vector<16x196xf32>
    %66 = arith.maximumf %64, %65 : vector<16x196xf32>
    %67 = arith.truncf %66 : vector<16x196xf32> to vector<16x196xbf16>
    %c0_23 = arith.constant 0 : index
    %c0_24 = arith.constant 0 : index
    %68 = vector.load %arg4[%c0_23, %c0_24] : memref<196x10xbf16, #tpu.memory_space<vmem>>, vector<196x10xbf16>
    %cst_25 = arith.constant dense<0.000000e+00> : vector<16x10xf32>
    %69 = tpu.matmul %67, %68, %cst_25 {dimension_numbers = #tpu.dot_dimension_numbers<[1], [0], [0], [1], [0, 0, 1, 1], [], []>} : vector<16x196xbf16>, vector<196x10xbf16>, vector<16x10xf32> -> vector<16x10xf32>
    %70 = vector.extract_strided_slice %69 {offsets = [0, 0], sizes = [8, 10], strides = [1, 1]} : vector<16x10xf32> to vector<8x10xf32>
    %cst_26 = arith.constant dense<0.000000e+00> : vector<10xf32>
    %71 = vector.multi_reduction <add>, %70, %cst_26 [0] : vector<8x10xf32> to vector<10xf32>
    %72 = vector.shape_cast %71 : vector<10xf32> to vector<1x10xf32>
    %cst_27 = arith.constant 8.000000e+00 : f32
    %73 = vector.broadcast %cst_27 : f32 to vector<1x10xf32>
    %74 = arith.divf %72, %73 : vector<1x10xf32>
    %75 = vector.broadcast %74 : vector<1x10xf32> to vector<8x10xf32>
    %76 = arith.subf %70, %75 : vector<8x10xf32>
    %77 = arith.mulf %76, %76 : vector<8x10xf32>
    %cst_28 = arith.constant dense<0.000000e+00> : vector<10xf32>
    %78 = vector.multi_reduction <add>, %77, %cst_28 [0] : vector<8x10xf32> to vector<10xf32>
    %79 = vector.shape_cast %78 : vector<10xf32> to vector<1x10xf32>
    %cst_29 = arith.constant 8.000000e+00 : f32
    %80 = vector.broadcast %cst_29 : f32 to vector<1x10xf32>
    %81 = arith.divf %79, %80 : vector<1x10xf32>
    %cst_30 = arith.constant 9.99999974E-6 : f32
    %82 = vector.broadcast %cst_30 : f32 to vector<1x10xf32>
    %83 = arith.addf %81, %82 : vector<1x10xf32>
    %84 = math.rsqrt %83 : vector<1x10xf32>
    %85 = arith.mulf %2, %84 : vector<1x10xf32>
    %86 = arith.mulf %74, %85 : vector<1x10xf32>
    %87 = arith.subf %3, %86 : vector<1x10xf32>
    %88 = vector.extract_strided_slice %69 {offsets = [8, 0], sizes = [8, 10], strides = [1, 1]} : vector<16x10xf32> to vector<8x10xf32>
    %cst_31 = arith.constant dense<0.000000e+00> : vector<10xf32>
    %89 = vector.multi_reduction <add>, %88, %cst_31 [0] : vector<8x10xf32> to vector<10xf32>
    %90 = vector.shape_cast %89 : vector<10xf32> to vector<1x10xf32>
    %cst_32 = arith.constant 8.000000e+00 : f32
    %91 = vector.broadcast %cst_32 : f32 to vector<1x10xf32>
    %92 = arith.divf %90, %91 : vector<1x10xf32>
    %93 = vector.broadcast %92 : vector<1x10xf32> to vector<8x10xf32>
    %94 = arith.subf %88, %93 : vector<8x10xf32>
    %95 = arith.mulf %94, %94 : vector<8x10xf32>
    %cst_33 = arith.constant dense<0.000000e+00> : vector<10xf32>
    %96 = vector.multi_reduction <add>, %95, %cst_33 [0] : vector<8x10xf32> to vector<10xf32>
    %97 = vector.shape_cast %96 : vector<10xf32> to vector<1x10xf32>
    %cst_34 = arith.constant 8.000000e+00 : f32
    %98 = vector.broadcast %cst_34 : f32 to vector<1x10xf32>
    %99 = arith.divf %97, %98 : vector<1x10xf32>
    %cst_35 = arith.constant 9.99999974E-6 : f32
    %100 = vector.broadcast %cst_35 : f32 to vector<1x10xf32>
    %101 = arith.addf %99, %100 : vector<1x10xf32>
    %102 = math.rsqrt %101 : vector<1x10xf32>
    %103 = arith.mulf %2, %102 : vector<1x10xf32>
    %104 = arith.mulf %92, %103 : vector<1x10xf32>
    %105 = arith.subf %3, %104 : vector<1x10xf32>
    %106 = vector.shape_cast %10 : vector<16x1xi1> to vector<16x1xi1>
    %107 = vector.broadcast %106 : vector<16x1xi1> to vector<16x10xi1>
    %108 = vector.shape_cast %85 : vector<1x10xf32> to vector<1x10xf32>
    %109 = vector.broadcast %108 : vector<1x10xf32> to vector<16x10xf32>
    %110 = vector.shape_cast %103 : vector<1x10xf32> to vector<1x10xf32>
    %111 = vector.broadcast %110 : vector<1x10xf32> to vector<16x10xf32>
    %112 = arith.select %107, %109, %111 : vector<16x10xi1>, vector<16x10xf32>
    %113 = vector.shape_cast %10 : vector<16x1xi1> to vector<16x1xi1>
    %114 = vector.broadcast %113 : vector<16x1xi1> to vector<16x10xi1>
    %115 = vector.shape_cast %87 : vector<1x10xf32> to vector<1x10xf32>
    %116 = vector.broadcast %115 : vector<1x10xf32> to vector<16x10xf32>
    %117 = vector.shape_cast %105 : vector<1x10xf32> to vector<1x10xf32>
    %118 = vector.broadcast %117 : vector<1x10xf32> to vector<16x10xf32>
    %119 = arith.select %114, %116, %118 : vector<16x10xi1>, vector<16x10xf32>
    %120 = arith.mulf %69, %112 : vector<16x10xf32>
    %121 = arith.addf %120, %119 : vector<16x10xf32>
    %cst_36 = arith.constant dense<0xFF800000> : vector<16xf32>
    %122 = vector.multi_reduction <maximumf>, %121, %cst_36 [1] : vector<16x10xf32> to vector<16xf32>
    %123 = vector.shape_cast %122 : vector<16xf32> to vector<16x1xf32>
    %124 = vector.broadcast %123 : vector<16x1xf32> to vector<16x10xf32>
    %125 = arith.subf %121, %124 : vector<16x10xf32>
    %126 = math.exp %125 : vector<16x10xf32>
    %cst_37 = arith.constant dense<0.000000e+00> : vector<16xf32>
    %127 = vector.multi_reduction <add>, %126, %cst_37 [1] : vector<16x10xf32> to vector<16xf32>
    %128 = vector.shape_cast %127 : vector<16xf32> to vector<16x1xf32>
    %129 = tpu.reciprocal %128 {approx = true} : vector<16x1xf32> -> vector<16x1xf32>
    %130 = vector.broadcast %129 : vector<16x1xf32> to vector<16x10xf32>
    %131 = arith.mulf %126, %130 : vector<16x10xf32>
    %132 = vector.extract_strided_slice %131 {offsets = [0, 0], sizes = [8, 10], strides = [1, 1]} : vector<16x10xf32> to vector<8x10xf32>
    %133 = vector.extract_strided_slice %131 {offsets = [8, 0], sizes = [8, 10], strides = [1, 1]} : vector<16x10xf32> to vector<8x10xf32>
    %c0_38 = arith.constant 0 : index
    %c0_39 = arith.constant 0 : index
    %134 = vector.load %arg6[%c0_38, %c0_39] : memref<6x10xf32, #tpu.memory_space<vmem>>, vector<1x10xf32>
    %c1_40 = arith.constant 1 : index
    %c0_41 = arith.constant 0 : index
    %135 = vector.load %arg6[%c1_40, %c0_41] : memref<6x10xf32, #tpu.memory_space<vmem>>, vector<1x10xf32>
    %c2 = arith.constant 2 : index
    %c0_42 = arith.constant 0 : index
    %136 = vector.load %arg6[%c2, %c0_42] : memref<6x10xf32, #tpu.memory_space<vmem>>, vector<1x10xf32>
    %c3 = arith.constant 3 : index
    %c0_43 = arith.constant 0 : index
    %137 = vector.load %arg6[%c3, %c0_43] : memref<6x10xf32, #tpu.memory_space<vmem>>, vector<1x10xf32>
    %c4 = arith.constant 4 : index
    %c0_44 = arith.constant 0 : index
    %138 = vector.load %arg6[%c4, %c0_44] : memref<6x10xf32, #tpu.memory_space<vmem>>, vector<1x1xf32>
    %c5 = arith.constant 5 : index
    %c0_45 = arith.constant 0 : index
    %139 = vector.load %arg6[%c5, %c0_45] : memref<6x10xf32, #tpu.memory_space<vmem>>, vector<1x1xf32>
    %140 = vector.broadcast %134 : vector<1x10xf32> to vector<8x10xf32>
    %141 = arith.mulf %132, %140 : vector<8x10xf32>
    %142 = vector.broadcast %135 : vector<1x10xf32> to vector<8x10xf32>
    %143 = arith.mulf %133, %142 : vector<8x10xf32>
    %144 = arith.addf %141, %143 : vector<8x10xf32>
    %cst_46 = arith.constant dense<0.000000e+00> : vector<8xf32>
    %145 = vector.multi_reduction <add>, %144, %cst_46 [1] : vector<8x10xf32> to vector<8xf32>
    %146 = vector.shape_cast %145 : vector<8xf32> to vector<8x1xf32>
    %147 = vector.broadcast %138 : vector<1x1xf32> to vector<8x1xf32>
    %148 = arith.addf %146, %147 : vector<8x1xf32>
    %149 = vector.broadcast %136 : vector<1x10xf32> to vector<8x10xf32>
    %150 = arith.mulf %132, %149 : vector<8x10xf32>
    %151 = vector.broadcast %137 : vector<1x10xf32> to vector<8x10xf32>
    %152 = arith.mulf %133, %151 : vector<8x10xf32>
    %153 = arith.addf %150, %152 : vector<8x10xf32>
    %cst_47 = arith.constant dense<0.000000e+00> : vector<8xf32>
    %154 = vector.multi_reduction <add>, %153, %cst_47 [1] : vector<8x10xf32> to vector<8xf32>
    %155 = vector.shape_cast %154 : vector<8xf32> to vector<8x1xf32>
    %156 = vector.broadcast %139 : vector<1x1xf32> to vector<8x1xf32>
    %157 = arith.addf %155, %156 : vector<8x1xf32>
    %158 = arith.maximumf %148, %157 : vector<8x1xf32>
    %159 = arith.subf %148, %158 : vector<8x1xf32>
    %160 = math.exp %159 : vector<8x1xf32>
    %161 = arith.subf %157, %158 : vector<8x1xf32>
    %162 = math.exp %161 : vector<8x1xf32>
    %163 = arith.addf %160, %162 : vector<8x1xf32>
    %164 = tpu.reciprocal %163 {approx = true} : vector<8x1xf32> -> vector<8x1xf32>
    %165 = tpu.iota {dimensions = array<i32: 1>} : vector<8x2xi32>
    %c0_i32 = arith.constant 0 : i32
    %166 = vector.broadcast %c0_i32 : i32 to vector<8x2xi32>
    %167 = arith.cmpi eq, %165, %166 : vector<8x2xi32>
    %168 = arith.mulf %160, %164 : vector<8x1xf32>
    %169 = arith.mulf %162, %164 : vector<8x1xf32>
    %170 = vector.shape_cast %168 : vector<8x1xf32> to vector<8x1xf32>
    %171 = vector.broadcast %170 : vector<8x1xf32> to vector<8x2xf32>
    %172 = vector.shape_cast %169 : vector<8x1xf32> to vector<8x1xf32>
    %173 = vector.broadcast %172 : vector<8x1xf32> to vector<8x2xf32>
    %174 = arith.select %167, %171, %173 : vector<8x2xi1>, vector<8x2xf32>
    %c0_48 = arith.constant 0 : index
    %c0_49 = arith.constant 0 : index
    %175 = vector.load %arg7[%c0_48, %c0_49] : memref<8x2xf32, #tpu.memory_space<vmem>>, vector<8x2xf32>
    tpu.vector_store %arg7[%c0_48, %c0_49], %174 {strides = array<i32>} : memref<8x2xf32, #tpu.memory_space<vmem>>, vector<8x2xf32>,
    return
  }
}

</mosaic_0001>

<llo_original>
// kernel: tpu_custom_call.1
$region0: #{tpu_custom_call.1}
  #allocation0 [shape = 'u32[]', space=smem, size = 0x4, offset = 0x4, fixed_abs, tag = 'smem constant byte address 0x4 - core index']
  #allocation1 [shape = 'u32[72,128]{1,0:T(1,128)}', space=vmem, size = 0x9000, scoped, tag = 'internal scratch']
  %s0 = inlined_call_operand.vmem [shape: f32[8,196], index: 0, kind: input, shape index: {}]
  %s1 = inlined_call_operand.vmem [shape: f32[8,196], index: 1, kind: input, shape index: {}]
  %s2 = inlined_call_operand.hbm [shape: bf16[196,196], index: 2, kind: input, shape index: {}]
  %s3 = inlined_call_operand.vmem [shape: f32[2,196], index: 3, kind: input, shape index: {}]
  %s4 = inlined_call_operand.vmem [shape: bf16[196,10], index: 4, kind: input, shape index: {}]
  %s5 = inlined_call_operand.vmem [shape: f32[2,10], index: 5, kind: input, shape index: {}]
  %s6 = inlined_call_operand.vmem [shape: f32[6,10], index: 6, kind: input, shape index: {}]
  %s7 = inlined_call_operand.vmem [shape: f32[8,2], index: 7, kind: output, shape index: {}]
  %s8 = sld [smem:[#allocation0]]
  $region42: #{tpu_custom_call.1} parent=0
    _
  %s10 = ssub.s32 1, %s8
  %s11 = scalar_select 0, %s10, %s8
  $region1: #{tpu_custom_call.1} parent=0
    #allocation2 [shape = 'u8[102400]{0}', space=vmem, size = 0x19000, scoped, tag = 'input window, operand 2, single buffered']
    #allocation3 [shape = 's32[1]{0}', space=sflag, size = 0x4, scoped, tag = 'scoped memory for tpu_custom_call.1']
    %12 = vsyncpa [#allocation3], 0
    // Predicated region
    $region2: #{tpu_custom_call.1} parent=1 // pred_check
      _
    $region3: #{tpu_custom_call.1} parent=1 // pred_check_branch
      %14 = sbr.rel (0) target = $region5
    $region4: #{tpu_custom_call.1} parent=1 // pred_region
      _
    $region5: #{tpu_custom_call.1} parent=1 // pred_fallthru
      _
    // Predicated region
    $region6: #{tpu_custom_call.1} parent=1 // pred_check
      _
    $region7: #{tpu_custom_call.1} parent=1 // pred_check_branch
      %16 = sbr.rel (0) target = $region9
    $region8: #{tpu_custom_call.1} parent=1 // pred_region
      _
    $region9: #{tpu_custom_call.1} parent=1 // pred_fallthru
      _
    // Predicated region
    $region10: #{tpu_custom_call.1} parent=1 // pred_check
      _
    $region11: #{tpu_custom_call.1} parent=1 // pred_check_branch
      %18 = sbr.rel (0) target = $region13
    $region12: #{tpu_custom_call.1} parent=1 // pred_region
      %20 = vsyncadd [#allocation3], 0
      %s21 = sshll.u32 %s2, 4
      %s22 = int_to_ptr.hbm [resolvable:$true] %s21
      %s23 = sshll.u32 [#allocation2], 4
      %s24 = int_to_ptr.vmem [resolvable:$true] %s23
      %29 = dma.hbm_to_vmem [thread:$0]  %s22, 3200, %s24, [#allocation3], 128, 128, 8
    $region13: #{tpu_custom_call.1} parent=1 // pred_fallthru
      _
    // Predicated region
    $region14: #{tpu_custom_call.1} parent=1 // pred_check
      _
    $region15: #{tpu_custom_call.1} parent=1 // pred_check_branch
      %31 = sbr.rel (0) target = $region17
    $region16: #{tpu_custom_call.1} parent=1 // pred_region
      _
    $region17: #{tpu_custom_call.1} parent=1 // pred_fallthru
      _
    // Predicated region
    $region18: #{tpu_custom_call.1} parent=1 // pred_check
      _
    $region19: #{tpu_custom_call.1} parent=1 // pred_check_branch
      %33 = sbr.rel (0) target = $region21
    $region20: #{tpu_custom_call.1} parent=1 // pred_region
      _
    $region21: #{tpu_custom_call.1} parent=1 // pred_fallthru
      _
    // Predicated region
    $region22: #{tpu_custom_call.1} parent=1 // pred_check
      _
    $region23: #{tpu_custom_call.1} parent=1 // pred_check_branch
      %35 = sbr.rel (0) target = $region25
    $region24: #{tpu_custom_call.1} parent=1 // pred_region
      _
    $region25: #{tpu_custom_call.1} parent=1 // pred_fallthru
      _
    // Predicated region
    $region26: #{tpu_custom_call.1} parent=1 // pred_check
      _
    $region27: #{tpu_custom_call.1} parent=1 // pred_check_branch
      %37 = sbr.rel (0) target = $region29
    $region28: #{tpu_custom_call.1} parent=1 // pred_region
      _
    $region29: #{tpu_custom_call.1} parent=1 // pred_fallthru
      _
    // Predicated region
    $region30: #{tpu_custom_call.1} parent=1 // pred_check
      _
    $region31: #{tpu_custom_call.1} parent=1 // pred_check_branch
      %39 = sbr.rel (0) target = $region33
    $region32: #{tpu_custom_call.1} parent=1 // pred_region
      %41 = dma.done [#allocation3], 3200
    $region33: #{tpu_custom_call.1} parent=1 // pred_fallthru
      _
    %v43 = vld [vmem:[%s3] ss:$2 sm:$0x3]
    %s44 = scalar_lea.vmem %s3, 1
    %v45 = vld [vmem:[%s44] ss:$2 sm:$0x3]
    %v46 = vld [vmem:[%s5] sm:$0x1]
    %v47 = vld [vmem:[%s5 + $0x1] sm:$0x1]
    %v48 = vld [vmem:[%s0] sm:$0xff]
    %v49 = vld [vmem:[%s0 + $0x8] sm:$0xff]
    %v50 = vld [vmem:[%s1] sm:$0xff]
    %v51 = vld [vmem:[%s1 + $0x8] sm:$0xff]
    %v52 = vpack.c.bf16 %v50, %v48
    %v53 = vpack.c.bf16 %v51, %v49
    %v54 = vlaneseq
    %v55 = vshrl.u32 %v54, 7
    %v56 = vadd.s32 %v55, 8
    %vm57 = vcmp.lt.s32.totalorder %v55, 8
    %vm58 = vcmp.lt.s32.totalorder %v56, 8
    %v59 = vld [vmem:[#allocation2] sm:$0xff]
    %v60 = vld [vmem:[#allocation2 + $0x8] sm:$0xff]
    %v61 = vld [vmem:[#allocation2 + $0x10] sm:$0xff]
    %v62 = vld [vmem:[#allocation2 + $0x18] sm:$0xff]
    %v63 = vld [vmem:[#allocation2 + $0x20] sm:$0xff]
    %v64 = vld [vmem:[#allocation2 + $0x28] sm:$0xff]
    %v65 = vld [vmem:[#allocation2 + $0x30] sm:$0xff]
    %v66 = vld [vmem:[#allocation2 + $0x38] sm:$0xff]
    %v67 = vld [vmem:[#allocation2 + $0x40] sm:$0xff]
    %v68 = vld [vmem:[#allocation2 + $0x48] sm:$0xff]
    %v69 = vld [vmem:[#allocation2 + $0x50] sm:$0xff]
    %v70 = vld [vmem:[#allocation2 + $0x58] sm:$0xff]
    %v71 = vld [vmem:[#allocation2 + $0x60] sm:$0xff]
    %v72 = vld [vmem:[#allocation2 + $0x68] sm:$0xff]
    %v73 = vld [vmem:[#allocation2 + $0x70] sm:$0xff]
    %v74 = vld [vmem:[#allocation2 + $0x78] sm:$0xff]
    %v75 = vld [vmem:[#allocation2 + $0x80] sm:$0xff]
    %v76 = vld [vmem:[#allocation2 + $0x88] sm:$0xff]
    %v77 = vld [vmem:[#allocation2 + $0x90] sm:$0xff]
    %v78 = vld [vmem:[#allocation2 + $0x98] sm:$0xff]
    %v79 = vld [vmem:[#allocation2 + $0xa0] sm:$0xff]
    %v80 = vld [vmem:[#allocation2 + $0xa8] sm:$0xff]
    %v81 = vld [vmem:[#allocation2 + $0xb0] sm:$0xff]
    %v82 = vld [vmem:[#allocation2 + $0xb8] sm:$0xff]
    %v83 = vld [vmem:[#allocation2 + $0xc0] sm:$0x33]
    %v109 = vunpack.c.l.b16 %v59
    %v110 = vunpack.c.h.b16 %v59
    %v111 = vunpack.c.l.b16 %v60
    %v112 = vunpack.c.h.b16 %v60
    %v113 = vunpack.c.l.b16 %v61
    %v114 = vunpack.c.h.b16 %v61
    %v115 = vunpack.c.l.b16 %v62
    %v116 = vunpack.c.h.b16 %v62
    %v117 = vunpack.c.l.b16 %v63
    %v118 = vunpack.c.h.b16 %v63
    %v119 = vunpack.c.l.b16 %v64
    %v120 = vunpack.c.h.b16 %v64
    %v121 = vunpack.c.l.b16 %v65
    %v122 = vunpack.c.h.b16 %v65
    %v123 = vunpack.c.l.b16 %v66
    %v124 = vunpack.c.h.b16 %v66
    %v125 = vunpack.c.l.b16 %v67
    %v126 = vunpack.c.h.b16 %v67
    %v127 = vunpack.c.l.b16 %v68
    %v128 = vunpack.c.h.b16 %v68
    %v129 = vunpack.c.l.b16 %v69
    %v130 = vunpack.c.h.b16 %v69
    %v131 = vunpack.c.l.b16 %v70
    %v132 = vunpack.c.h.b16 %v70
    %v133 = vunpack.c.l.b16 %v71
    %v134 = vunpack.c.h.b16 %v71
    %v135 = vunpack.c.l.b16 %v72
    %v136 = vunpack.c.h.b16 %v72
    %v137 = vunpack.c.l.b16 %v73
    %v138 = vunpack.c.h.b16 %v73
    %v139 = vunpack.c.l.b16 %v74
    %v140 = vunpack.c.h.b16 %v74
    %v141 = vunpack.c.l.b16 %v75
    %v142 = vunpack.c.h.b16 %v75
    %v143 = vunpack.c.l.b16 %v76
    %v144 = vunpack.c.h.b16 %v76
    %v145 = vunpack.c.l.b16 %v77
    %v146 = vunpack.c.h.b16 %v77
    %v147 = vunpack.c.l.b16 %v78
    %v148 = vunpack.c.h.b16 %v78
    %v149 = vunpack.c.l.b16 %v79
    %v150 = vunpack.c.h.b16 %v79
    %v151 = vunpack.c.l.b16 %v80
    %v152 = vunpack.c.h.b16 %v80
    %v153 = vunpack.c.l.b16 %v81
    %v154 = vunpack.c.h.b16 %v81
    %v155 = vunpack.c.l.b16 %v82
    %v156 = vunpack.c.h.b16 %v82
    %v157 = vunpack.c.l.b16 %v83
    %v158 = vunpack.c.h.b16 %v83
    %v159 = vpack.c.b16 %v111, %v109
    %v160 = vpack.c.b16 %v112, %v110
    %v161 = vpack.c.b16 %v115, %v113
    %v162 = vpack.c.b16 %v116, %v114
    %v163 = vpack.c.b16 %v119, %v117
    %v164 = vpack.c.b16 %v120, %v118
    %v165 = vpack.c.b16 %v123, %v121
    %v166 = vpack.c.b16 %v124, %v122
    %v167 = vpack.c.b16 %v127, %v125
    %v168 = vpack.c.b16 %v128, %v126
    %v169 = vpack.c.b16 %v131, %v129
    %v170 = vpack.c.b16 %v132, %v130
    %v171 = vpack.c.b16 %v135, %v133
    %v172 = vpack.c.b16 %v136, %v134
    %v173 = vpack.c.b16 %v139, %v137
    %v174 = vpack.c.b16 %v140, %v138
    %v175 = vpack.c.b16 %v143, %v141
    %v176 = vpack.c.b16 %v144, %v142
    %v177 = vpack.c.b16 %v147, %v145
    %v178 = vpack.c.b16 %v148, %v146
    %v179 = vpack.c.b16 %v151, %v149
    %v180 = vpack.c.b16 %v152, %v150
    %v181 = vpack.c.b16 %v155, %v153
    %v182 = vpack.c.b16 %v156, %v154
    %v183 = vpack.c.b16 %v157, %v157
    %v184 = vpack.c.b16 %v158, %v158
    %vm209 = vcmask 556032
    %v211 = vsel %vm209, %v53, 0
    %vm213 = vcmask 1041408
    %v215 = vsel %vm213, %v183, 0
    %v218 = vsel %vm213, %v184, 0
    %220 = vmatpush.bf16.msra.mxu0 %v173
    %221 = vmatpush.bf16.msra.mxu0 %v171
    %222 = vmatpush.bf16.msra.mxu0 %v169
    %223 = vmatpush.bf16.msra.mxu0 %v167
    %224 = vmatpush.bf16.msra.mxu0 %v165
    %225 = vmatpush.bf16.msra.mxu0 %v163
    %226 = vmatpush.bf16.msra.mxu0 %v161
    %227 = vmatpush.bf16.msra.mxu0 %v159
    %228 = vmatmul.bf16.gmra.mxu0 %v52
    %v229 = vpop.f32.mrf.mxu0
    %v230 = vadd.f32 0.0, %v229
    %v231 = vpop.f32.mrf.mxu0
    %v232 = vadd.f32 0.0, %v231
    %233 = vdwg.mxu0
    %234 = vmatpush.bf16.msra.mxu0 0
    %235 = vmatpush.bf16.msra.mxu0 0
    %236 = vmatpush.bf16.msra.mxu0 0
    %237 = vmatpush.bf16.msra.mxu0 %v215
    %238 = vmatpush.bf16.msra.mxu0 %v181
    %239 = vmatpush.bf16.msra.mxu0 %v179
    %240 = vmatpush.bf16.msra.mxu0 %v177
    %241 = vmatpush.bf16.msra.mxu0 %v175
    %242 = vmatmul.bf16.gmra.mxu0 %v211
    %v243 = vpop.f32.mrf.mxu0
    %v244 = vadd.f32 %v230, %v243
    %v245 = vpop.f32.mrf.mxu0
    %v246 = vadd.f32 %v232, %v245
    %247 = vdwg.mxu0
    %248 = vmatpush.bf16.msra.mxu0 %v174
    %249 = vmatpush.bf16.msra.mxu0 %v172
    %250 = vmatpush.bf16.msra.mxu0 %v170
    %251 = vmatpush.bf16.msra.mxu0 %v168
    %252 = vmatpush.bf16.msra.mxu0 %v166
    %253 = vmatpush.bf16.msra.mxu0 %v164
    %254 = vmatpush.bf16.msra.mxu0 %v162
    %255 = vmatpush.bf16.msra.mxu0 %v160
    %256 = vmatmul.bf16.gmra.mxu0 %v52
    %v257 = vpop.f32.mrf.mxu0
    %v258 = vadd.f32 0.0, %v257
    %v259 = vpop.f32.mrf.mxu0
    %v260 = vadd.f32 0.0, %v259
    %261 = vdwg.mxu0
    %262 = vmatpush.bf16.msra.mxu0 0
    %263 = vmatpush.bf16.msra.mxu0 0
    %264 = vmatpush.bf16.msra.mxu0 0
    %265 = vmatpush.bf16.msra.mxu0 %v218
    %266 = vmatpush.bf16.msra.mxu0 %v182
    %267 = vmatpush.bf16.msra.mxu0 %v180
    %268 = vmatpush.bf16.msra.mxu0 %v178
    %269 = vmatpush.bf16.msra.mxu0 %v176
    %270 = vmatmul.bf16.gmra.mxu0 %v211
    %v271 = vpop.f32.mrf.mxu0
    %v272 = vadd.f32 %v258, %v271
    %v273 = vpop.f32.mrf.mxu0
    %v274 = vadd.f32 %v260, %v273
    %275 = vdwg.mxu0
    %v276 = vrot.slane %v244, 4
    %v277 = vadd.f32 %v244, %v276
    %v278 = vrot.slane %v277, 2
    %v279 = vadd.f32 %v277, %v278
    %v280 = vrot.slane %v279, 1
    %v281 = vadd.f32 %v279, %v280
    %v282 = vsel %vm209, %v272, 0.0
    %v283 = vrot.slane %v282, 4
    %v284 = vadd.f32 %v282, %v283
    %v285 = vrot.slane %v284, 2
    %v286 = vadd.f32 %v284, %v285
    %v287 = vrot.slane %v286, 1
    %v288 = vadd.f32 %v286, %v287
    %v289 = vrcp.pop 8.0
    %v290 = vmul.f32 8.0, %v289
    %v291 = vsub.f32 1.0, %v290
    %v292 = vmul.f32 %v289, %v291
    %v293 = vadd.f32 %v289, %v292
    %vm294 = vweird.f32 %v289
    %v295 = vsel %vm294, %v289, %v293
    %v296 = vmul.f32 %v281, %v295
    %v297 = vmul.f32 %v288, %v295
    %v298 = vsub.f32 %v244, %v296
    %v299 = vsub.f32 %v272, %v297
    %v300 = vmul.f32 %v298, %v298
    %v301 = vmul.f32 %v299, %v299
    %v302 = vrot.slane %v300, 4
    %v303 = vadd.f32 %v300, %v302
    %v304 = vrot.slane %v303, 2
    %v305 = vadd.f32 %v303, %v304
    %v306 = vrot.slane %v305, 1
    %v307 = vadd.f32 %v305, %v306
    %v308 = vsel %vm209, %v301, 0.0
    %v309 = vrot.slane %v308, 4
    %v310 = vadd.f32 %v308, %v309
    %v311 = vrot.slane %v310, 2
    %v312 = vadd.f32 %v310, %v311
    %v313 = vrot.slane %v312, 1
    %v314 = vadd.f32 %v312, %v313
    %v315 = vmul.f32 %v307, %v295
    %v316 = vmul.f32 %v314, %v295
    %v317 = vadd.f32 %v315, 1e-05
    %v318 = vadd.f32 %v316, 1e-05
    %v319 = vrsqrt.pop %v317
    %v320 = vmul.f32 %v319, %v317
    %v321 = vmul.f32 %v320, %v319
    %v322 = vmul.f32 0.5, %v321
    %v323 = vsub.f32 1.5, %v322
    %v324 = vmul.f32 %v319, %v323
    %vm325 = vweird.f32 %v317
    %vm326 = vweird.f32 %v319
    %vm327 = vmor %vm325, %vm326
    %v328 = vsel %vm327, %v319, %v324
    %v329 = vrsqrt.pop %v318
    %v330 = vmul.f32 %v329, %v318
    %v331 = vmul.f32 %v330, %v329
    %v332 = vmul.f32 0.5, %v331
    %v333 = vsub.f32 1.5, %v332
    %v334 = vmul.f32 %v329, %v333
    %vm335 = vweird.f32 %v318
    %vm336 = vweird.f32 %v329
    %vm337 = vmor %vm335, %vm336
    %v338 = vsel %vm337, %v329, %v334
    %v341 = vrot.slane %v338, 7
    %vm342 = vcmask 1040384
    %v343 = vsel %vm342, %v328, %v341
    %v345 = vmul.f32 %v43, %v343
    %v347 = vperm.slane %v345, 0
    %v348 = vperm.slane %v345, 1
    %v351 = vmul.f32 %v296, %v347
    %v352 = vmul.f32 %v297, %v348
    %v355 = vrot.slane %v352, 7
    %v356 = vsel %vm342, %v351, %v355
    %v358 = vsub.f32 %v45, %v356
    %v359 = vrot.slane %v246, 4
    %v360 = vadd.f32 %v246, %v359
    %v361 = vrot.slane %v360, 2
    %v362 = vadd.f32 %v360, %v361
    %v363 = vrot.slane %v362, 1
    %v364 = vadd.f32 %v362, %v363
    %v365 = vsel %vm209, %v274, 0.0
    %v366 = vrot.slane %v365, 4
    %v367 = vadd.f32 %v365, %v366
    %v368 = vrot.slane %v367, 2
    %v369 = vadd.f32 %v367, %v368
    %v370 = vrot.slane %v369, 1
    %v371 = vadd.f32 %v369, %v370
    %v372 = vmul.f32 %v364, %v295
    %v373 = vmul.f32 %v371, %v295
    %v374 = vsub.f32 %v246, %v372
    %v375 = vsub.f32 %v274, %v373
    %v376 = vmul.f32 %v374, %v374
    %v377 = vmul.f32 %v375, %v375
    %v378 = vrot.slane %v376, 4
    %v379 = vadd.f32 %v376, %v378
    %v380 = vrot.slane %v379, 2
    %v381 = vadd.f32 %v379, %v380
    %v382 = vrot.slane %v381, 1
    %v383 = vadd.f32 %v381, %v382
    %v384 = vsel %vm209, %v377, 0.0
    %v385 = vrot.slane %v384, 4
    %v386 = vadd.f32 %v384, %v385
    %v387 = vrot.slane %v386, 2
    %v388 = vadd.f32 %v386, %v387
    %v389 = vrot.slane %v388, 1
    %v390 = vadd.f32 %v388, %v389
    %v391 = vmul.f32 %v383, %v295
    %v392 = vmul.f32 %v390, %v295
    %v393 = vadd.f32 %v391, 1e-05
    %v394 = vadd.f32 %v392, 1e-05
    %v395 = vrsqrt.pop %v393
    %v396 = vmul.f32 %v395, %v393
    %v397 = vmul.f32 %v396, %v395
    %v398 = vmul.f32 0.5, %v397
    %v399 = vsub.f32 1.5, %v398
    %v400 = vmul.f32 %v395, %v399
    %vm401 = vweird.f32 %v393
    %vm402 = vweird.f32 %v395
    %vm403 = vmor %vm401, %vm402
    %v404 = vsel %vm403, %v395, %v400
    %v405 = vrsqrt.pop %v394
    %v406 = vmul.f32 %v405, %v394
    %v407 = vmul.f32 %v406, %v405
    %v408 = vmul.f32 0.5, %v407
    %v409 = vsub.f32 1.5, %v408
    %v410 = vmul.f32 %v405, %v409
    %vm411 = vweird.f32 %v394
    %vm412 = vweird.f32 %v405
    %vm413 = vmor %vm411, %vm412
    %v414 = vsel %vm413, %v405, %v410
    %v417 = vrot.slane %v414, 7
    %v418 = vsel %vm342, %v404, %v417
    %v420 = vmul.f32 %v43, %v418
    %v422 = vperm.slane %v420, 0
    %v423 = vperm.slane %v420, 1
    %v426 = vmul.f32 %v372, %v422
    %v427 = vmul.f32 %v373, %v423
    %v430 = vrot.slane %v427, 7
    %v431 = vsel %vm342, %v426, %v430
    %v433 = vsub.f32 %v45, %v431
    %v434 = vsel %vm57, 1, 0
    %v435 = vsel %vm58, 1, 0
    %vm436 = vcmp.eq.s32.totalorder %v434, 1
    %vm437 = vcmp.eq.s32.totalorder %v435, 1
    %v438 = vsel %vm436, %v347, %v422
    %v439 = vsel %vm436, %v348, %v423
    %v440 = vsel %vm437, %v347, %v422
    %v441 = vsel %vm437, %v348, %v423
    %v443 = vperm.slane %v358, 0
    %v444 = vperm.slane %v358, 1
    %v448 = vperm.slane %v433, 0
    %v449 = vperm.slane %v433, 1
    %v452 = vsel %vm436, %v443, %v448
    %v453 = vsel %vm436, %v444, %v449
    %v454 = vsel %vm437, %v443, %v448
    %v455 = vsel %vm437, %v444, %v449
    %v456 = vmul.f32 %v244, %v438
    %v457 = vmul.f32 %v272, %v439
    %v458 = vmul.f32 %v246, %v440
    %v459 = vmul.f32 %v274, %v441
    %v460 = vadd.f32 %v456, %v452
    %v461 = vadd.f32 %v457, %v453
    %v462 = vadd.f32 %v458, %v454
    %v463 = vadd.f32 %v459, %v455
    %v464 = vmax.f32 %v460, 0.0
    %v465 = vmax.f32 %v461, 0.0
    %v466 = vmax.f32 %v462, 0.0
    %v467 = vmax.f32 %v463, 0.0
    %v468 = vpack.c.bf16 %v466, %v464
    %v469 = vpack.c.bf16 %v467, %v465
    %v470 = vld [vmem:[%s4] sm:$0xf]
    %v471 = vld [vmem:[%s4 + $0x4] sm:$0xf]
    %v472 = vld [vmem:[%s4 + $0x8] sm:$0xf]
    %v473 = vld [vmem:[%s4 + $0xc] sm:$0xf]
    %v474 = vld [vmem:[%s4 + $0x10] sm:$0xf]
    %v475 = vld [vmem:[%s4 + $0x14] sm:$0xf]
    %v476 = vld [vmem:[%s4 + $0x18] sm:$0xf]
    %v477 = vld [vmem:[%s4 + $0x1c] sm:$0xf]
    %v478 = vld [vmem:[%s4 + $0x20] sm:$0xf]
    %v479 = vld [vmem:[%s4 + $0x24] sm:$0xf]
    %v480 = vld [vmem:[%s4 + $0x28] sm:$0xf]
    %v481 = vld [vmem:[%s4 + $0x2c] sm:$0xf]
    %v482 = vld [vmem:[%s4 + $0x30] sm:$0xf]
    %v483 = vld [vmem:[%s4 + $0x34] sm:$0xf]
    %v484 = vld [vmem:[%s4 + $0x38] sm:$0xf]
    %v485 = vld [vmem:[%s4 + $0x3c] sm:$0xf]
    %v486 = vld [vmem:[%s4 + $0x40] sm:$0xf]
    %v487 = vld [vmem:[%s4 + $0x44] sm:$0xf]
    %v488 = vld [vmem:[%s4 + $0x48] sm:$0xf]
    %v489 = vld [vmem:[%s4 + $0x4c] sm:$0xf]
    %v490 = vld [vmem:[%s4 + $0x50] sm:$0xf]
    %v491 = vld [vmem:[%s4 + $0x54] sm:$0xf]
    %v492 = vld [vmem:[%s4 + $0x58] sm:$0xf]
    %v493 = vld [vmem:[%s4 + $0x5c] sm:$0xf]
    %v494 = vld [vmem:[%s4 + $0x60] sm:$0x3]
    %v520 = vunpack.c.l.b16 %v470
    %v521 = vunpack.c.l.b16 %v471
    %v522 = vunpack.c.l.b16 %v472
    %v523 = vunpack.c.l.b16 %v473
    %v524 = vunpack.c.l.b16 %v474
    %v525 = vunpack.c.l.b16 %v475
    %v526 = vunpack.c.l.b16 %v476
    %v527 = vunpack.c.l.b16 %v477
    %v528 = vunpack.c.l.b16 %v478
    %v529 = vunpack.c.l.b16 %v479
    %v530 = vunpack.c.l.b16 %v480
    %v531 = vunpack.c.l.b16 %v481
    %v532 = vunpack.c.l.b16 %v482
    %v533 = vunpack.c.l.b16 %v483
    %v534 = vunpack.c.l.b16 %v484
    %v535 = vunpack.c.l.b16 %v485
    %v536 = vunpack.c.l.b16 %v486
    %v537 = vunpack.c.l.b16 %v487
    %v538 = vunpack.c.l.b16 %v488
    %v539 = vunpack.c.l.b16 %v489
    %v540 = vunpack.c.l.b16 %v490
    %v541 = vunpack.c.l.b16 %v491
    %v542 = vunpack.c.l.b16 %v492
    %v543 = vunpack.c.l.b16 %v493
    %v544 = vunpack.c.l.b16 %v494
    %v545 = vpack.c.b16 %v521, %v520
    %v546 = vpack.c.b16 %v523, %v522
    %v547 = vpack.c.b16 %v525, %v524
    %v548 = vpack.c.b16 %v527, %v526
    %v549 = vpack.c.b16 %v529, %v528
    %v550 = vpack.c.b16 %v531, %v530
    %v551 = vpack.c.b16 %v533, %v532
    %v552 = vpack.c.b16 %v535, %v534
    %v553 = vpack.c.b16 %v537, %v536
    %v554 = vpack.c.b16 %v539, %v538
    %v555 = vpack.c.b16 %v541, %v540
    %v556 = vpack.c.b16 %v543, %v542
    %v557 = vpack.c.b16 %v544, %v544
    %v571 = vsel %vm209, %v469, 0
    %v574 = vsel %vm213, %v557, 0
    %576 = vmatpush.bf16.msra.mxu0 %v552
    %577 = vmatpush.bf16.msra.mxu0 %v551
    %578 = vmatpush.bf16.msra.mxu0 %v550
    %579 = vmatpush.bf16.msra.mxu0 %v549
    %580 = vmatpush.bf16.msra.mxu0 %v548
    %581 = vmatpush.bf16.msra.mxu0 %v547
    %582 = vmatpush.bf16.msra.mxu0 %v546
    %583 = vmatpush.bf16.msra.mxu0 %v545
    %584 = vmatmul.bf16.gmra.mxu0 %v468
    %v585 = vpop.f32.mrf.mxu0
    %v586 = vadd.f32 0.0, %v585
    %v587 = vpop.f32.mrf.mxu0
    %v588 = vadd.f32 0.0, %v587
    %589 = vdwg.mxu0
    %590 = vmatpush.bf16.msra.mxu0 0
    %591 = vmatpush.bf16.msra.mxu0 0
    %592 = vmatpush.bf16.msra.mxu0 0
    %593 = vmatpush.bf16.msra.mxu0 %v574
    %594 = vmatpush.bf16.msra.mxu0 %v556
    %595 = vmatpush.bf16.msra.mxu0 %v555
    %596 = vmatpush.bf16.msra.mxu0 %v554
    %597 = vmatpush.bf16.msra.mxu0 %v553
    %598 = vmatmul.bf16.gmra.mxu0 %v571
    %v599 = vpop.f32.mrf.mxu0
    %v600 = vadd.f32 %v586, %v599
    %v601 = vpop.f32.mrf.mxu0
    %v602 = vadd.f32 %v588, %v601
    %603 = vdwg.mxu0
    %vm604 = vcmask 80896
    %v605 = vsel %vm604, %v600, 0.0
    %v606 = vrot.slane %v605, 4
    %v607 = vadd.f32 %v605, %v606
    %v608 = vrot.slane %v607, 2
    %v609 = vadd.f32 %v607, %v608
    %v610 = vrot.slane %v609, 1
    %v611 = vadd.f32 %v609, %v610
    %v612 = vmul.f32 %v611, %v295
    %v613 = vsub.f32 %v600, %v612
    %v614 = vmul.f32 %v613, %v613
    %v615 = vsel %vm604, %v614, 0.0
    %v616 = vrot.slane %v615, 4
    %v617 = vadd.f32 %v615, %v616
    %v618 = vrot.slane %v617, 2
    %v619 = vadd.f32 %v617, %v618
    %v620 = vrot.slane %v619, 1
    %v621 = vadd.f32 %v619, %v620
    %v622 = vmul.f32 %v621, %v295
    %v623 = vadd.f32 %v622, 1e-05
    %v624 = vrsqrt.pop %v623
    %v625 = vmul.f32 %v624, %v623
    %v626 = vmul.f32 %v625, %v624
    %v627 = vmul.f32 0.5, %v626
    %v628 = vsub.f32 1.5, %v627
    %v629 = vmul.f32 %v624, %v628
    %vm630 = vweird.f32 %v623
    %vm631 = vweird.f32 %v624
    %vm632 = vmor %vm630, %vm631
    %v633 = vsel %vm632, %v624, %v629
    %v634 = vmul.f32 %v46, %v633
    %v635 = vmul.f32 %v612, %v634
    %v636 = vsub.f32 %v47, %v635
    %v637 = vsel %vm604, %v602, 0.0
    %v638 = vrot.slane %v637, 4
    %v639 = vadd.f32 %v637, %v638
    %v640 = vrot.slane %v639, 2
    %v641 = vadd.f32 %v639, %v640
    %v642 = vrot.slane %v641, 1
    %v643 = vadd.f32 %v641, %v642
    %v644 = vmul.f32 %v643, %v295
    %v645 = vsub.f32 %v602, %v644
    %v646 = vmul.f32 %v645, %v645
    %v647 = vsel %vm604, %v646, 0.0
    %v648 = vrot.slane %v647, 4
    %v649 = vadd.f32 %v647, %v648
    %v650 = vrot.slane %v649, 2
    %v651 = vadd.f32 %v649, %v650
    %v652 = vrot.slane %v651, 1
    %v653 = vadd.f32 %v651, %v652
    %v654 = vmul.f32 %v653, %v295
    %v655 = vadd.f32 %v654, 1e-05
    %v656 = vrsqrt.pop %v655
    %v657 = vmul.f32 %v656, %v655
    %v658 = vmul.f32 %v657, %v656
    %v659 = vmul.f32 0.5, %v658
    %v660 = vsub.f32 1.5, %v659
    %v661 = vmul.f32 %v656, %v660
    %vm662 = vweird.f32 %v655
    %vm663 = vweird.f32 %v656
    %vm664 = vmor %vm662, %vm663
    %v665 = vsel %vm664, %v656, %v661
    %v666 = vmul.f32 %v46, %v665
    %v667 = vmul.f32 %v644, %v666
    %v668 = vsub.f32 %v47, %v667
    %v669 = vperm.slane %v634, 0
    %v670 = vperm.slane %v666, 0
    %v671 = vsel %vm436, %v669, %v670
    %v672 = vsel %vm437, %v669, %v670
    %v673 = vperm.slane %v636, 0
    %v674 = vperm.slane %v668, 0
    %v675 = vsel %vm436, %v673, %v674
    %v676 = vsel %vm437, %v673, %v674
    %v677 = vmul.f32 %v600, %v671
    %v678 = vmul.f32 %v602, %v672
    %v679 = vadd.f32 %v677, %v675
    %v680 = vadd.f32 %v678, %v676
    %v681 = vsel %vm604, %v679, -inf
    %682 = vmax.xlane.f32.xlu0 %v681
    %v683 = vpop.xlane.xlu0 %682
    %v684 = vsel %vm604, %v680, -inf
    %685 = vmax.xlane.f32.xlu0 %v684
    %v686 = vpop.xlane.xlu0 %685
    %v687 = vsub.f32 %v679, %v683
    %v688 = vsub.f32 %v680, %v686
    %v689 = vmul.f32 %v687, 1.442695
    %v690 = vpow.pop %v689
    %v691 = vmul.f32 %v688, 1.442695
    %v692 = vpow.pop %v691
    %v693 = vsel %vm604, %v690, 0.0
    %694 = vadd.xlane.f32.xlu0 %v693
    %v695 = vpop.xlane.xlu0 %694
    %v696 = vsel %vm604, %v692, 0.0
    %697 = vadd.xlane.f32.xlu0 %v696
    %v698 = vpop.xlane.xlu0 %697
    %v699 = vrcp.pop %v695
    %v700 = vrcp.pop %v698
    %v701 = vmul.f32 %v690, %v699
    %v702 = vmul.f32 %v692, %v700
    %v703 = vld [vmem:[%s6] sm:$0x1]
    %v704 = vld [vmem:[%s6 + $0x1] sm:$0x1]
    %v705 = vld [vmem:[%s6 + $0x2] sm:$0x1]
    %v706 = vld [vmem:[%s6 + $0x3] sm:$0x1]
    %v707 = vld [vmem:[%s6 + $0x4] sm:$0x1]
    %v708 = vld [vmem:[%s6 + $0x5] sm:$0x1]
    %v709 = vperm.slane %v703, 0
    %v710 = vmul.f32 %v701, %v709
    %v711 = vperm.slane %v704, 0
    %v712 = vmul.f32 %v702, %v711
    %v713 = vadd.f32 %v710, %v712
    %v714 = vsel %vm604, %v713, 0.0
    %715 = vadd.xlane.f32.xlu0 %v714
    %v716 = vpop.xlane.xlu0 %715
    %v717 = vperm.slane %v707, 0
    %v718 = vadd.f32 %v716, %v717
    %v719 = vperm.slane %v705, 0
    %v720 = vmul.f32 %v701, %v719
    %v721 = vperm.slane %v706, 0
    %v722 = vmul.f32 %v702, %v721
    %v723 = vadd.f32 %v720, %v722
    %v724 = vsel %vm604, %v723, 0.0
    %725 = vadd.xlane.f32.xlu0 %v724
    %v726 = vpop.xlane.xlu0 %725
    %v727 = vperm.slane %v708, 0
    %v728 = vadd.f32 %v726, %v727
    %v729 = vmax.f32 %v718, %v728
    %v730 = vsub.f32 %v718, %v729
    %v731 = vmul.f32 %v730, 1.442695
    %v732 = vpow.pop %v731
    %v733 = vsub.f32 %v728, %v729
    %v734 = vmul.f32 %v733, 1.442695
    %v735 = vpow.pop %v734
    %v736 = vadd.f32 %v732, %v735
    %v737 = vrcp.pop %v736
    %v738 = vlaneseq
    %v739 = vand.u32 %v738, 127
    %vm740 = vcmp.eq.s32.totalorder %v739, 0
    %v741 = vmul.f32 %v732, %v737
    %v742 = vmul.f32 %v735, %v737
    %744 = vset.pattern.permute.xlu0 0
    %745 = vperm.xlu0 %744, %v741
    %v746 = vpop.permute.xlu0 %745
    %749 = vset.pattern.permute.xlu0 0
    %750 = vperm.xlu0 %749, %v742
    %v751 = vpop.permute.xlu0 %750
    %v753 = vsel %vm740, %v746, %v751
    %vm754 = vcmask 15360
    %755 = vst.msk [vmem:[%s7] sm:$0xff] %vm754, %v753
    // Predicated region
    $region34: #{tpu_custom_call.1} parent=1 // pred_check
      _
    $region35: #{tpu_custom_call.1} parent=1 // pred_check_branch
      %757 = sbr.rel (0) target = $region37
    $region36: #{tpu_custom_call.1} parent=1 // pred_region
      _
    $region37: #{tpu_custom_call.1} parent=1 // pred_fallthru
      _
    // Predicated region
    $region38: #{tpu_custom_call.1} parent=1 // pred_check
      _
    $region39: #{tpu_custom_call.1} parent=1 // pred_check_branch
      %759 = sbr.rel (0) target = $region41
    $region40: #{tpu_custom_call.1} parent=1 // pred_region
      _
    $region41: #{tpu_custom_call.1} parent=1 // pred_fallthru
      _
    %760 = vsyncpa [#allocation3], 1

</llo_original>
